<compile_context>
chip_gen: v6e
topology: v6e:2x2x1
jax: 0.10.0
libtpu: 0.0.40
codegen_flags: <defaults>
</compile_context>

<pallas_src>
import functools

import jax
import jax.numpy as jnp
from jax import lax
from jax.experimental import pallas as pl
from jax.experimental.pallas import tpu as pltpu

_LANE = 128
_MAX_SLABS_PER_BLOCK = 1024   # one slab = 4 KiB raw -> <= 4 MiB per input block
_MAX_BATCH_FOLD = 8           # batch rows folded into one grid step for small images
_NEG_LOGIT = -1e4             # exp(-1e4) == 0 in f32; representable in f16/bf16


def _partial_terms(x_raw, t_raw, slab_start, *, n_slabs, mask_tail):
    """Per-chunk partial sums (bce, s*t, s, t), each reduced to a (sub, 128) slab."""
    x = x_raw.astype(jnp.float32)
    t = t_raw.astype(jnp.float32)
    if mask_tail:
        # Chunk-axis overhang past the real slab extent holds garbage: replace it with a
        # very negative logit / zero target so it contributes exactly 0 to every sum.
        slab_in_chunk = lax.broadcasted_iota(jnp.int32, x.shape, 0)
        valid = slab_in_chunk < (n_slabs - slab_start)
        x = jnp.where(valid, x, _NEG_LOGIT)
        t = jnp.where(valid, t, 0.0)
    # One transcendental pair per element, shared by BCE and sigmoid.
    e = jnp.exp(-jnp.abs(x))
    # Stable BCE-with-logits: max(x,0) - x*t + log1p(exp(-|x|))
    bce = jnp.maximum(x, 0.0) - x * t + jnp.log1p(e)
    # Stable sigmoid sharing e; approx reciprocal runs on the EUP (frees VALU slots).
    s = jnp.where(x >= 0.0, 1.0, e) * pl.reciprocal(1.0 + e, approx=True)
    return (jnp.sum(bce, axis=0), jnp.sum(s * t, axis=0),
            jnp.sum(s, axis=0), jnp.sum(t, axis=0))


def _loss_kernel(x_ref, t_ref, bce_ref, st_ref, ssum_ref, tsum_ref, *,
                 b_tile, tr8, chunk, sub, n_slabs, mask_tail):
    """grid = (batch-groups [parallel], slab-chunks [parallel]).

    x_ref/t_ref blocks: (b_tile, tr8, sub, 128). Each grid step writes 4 per-row partial
    scalars into (b_tile, 1, 1, 1) output blocks; the tiny combine happens in JAX.
    """
    c = pl.program_id(1)
    chunk_base = c * tr8                      # global slab index of this block's start
    full_iters = tr8 // chunk
    rem = tr8 - full_iters * chunk
    terms = functools.partial(_partial_terms, n_slabs=n_slabs, mask_tail=mask_tail)

    for b in range(b_tile):                   # static unroll, b_tile <= 8
        zero = jnp.zeros((sub, _LANE), jnp.float32)
        acc = (zero, zero, zero, zero)

        def body(i, carry, b=b):
            off = pl.multiple_of(i * chunk, chunk)
            p = terms(x_ref[b, pl.ds(off, chunk)],
                      t_ref[b, pl.ds(off, chunk)],
                      chunk_base + off)
            return tuple(a + q for a, q in zip(carry, p))

        if full_iters > 0:
            acc = lax.fori_loop(0, full_iters, body, acc)
        if rem > 0:
            off = full_iters * chunk
            p = terms(x_ref[b, pl.ds(off, rem)],
                      t_ref[b, pl.ds(off, rem)],
                      chunk_base + off)
            acc = tuple(a + q for a, q in zip(acc, p))

        # One cross-lane (XLU) reduce per quantity per row, per grid step.
        bce_ref[b] = jnp.sum(acc[0]).reshape(1, 1, 1)
        st_ref[b] = jnp.sum(acc[1]).reshape(1, 1, 1)
        ssum_ref[b] = jnp.sum(acc[2]).reshape(1, 1, 1)
        tsum_ref[b] = jnp.sum(acc[3]).reshape(1, 1, 1)


def _largest_divisor_at_most(n, cap):
    cap = max(1, min(n, cap))
    for d in range(cap, 0, -1):
        if n % d == 0:
            return d
    return 1


def loss_with_logit(out, target, eps=1e-6):
    """BCEWithLogitsLoss(mean) + DicewithLogitLoss for NCHW inputs (matches PyTorch)."""
    if out.shape != target.shape:
        raise ValueError("out and target must have the same shape")
    N = out.shape[0]
    M = 1
    for d in out.shape[1:]:
        M *= d

    x = out
    t = target
    if x.dtype not in (jnp.float32, jnp.bfloat16, jnp.float16):
        x = x.astype(jnp.float32)
    if t.dtype != x.dtype:
        # TODO(synk): keep narrow (uint8/bf16) targets un-cast to save HBM bandwidth;
        # that needs per-input sublane geometry, so dtypes are unified here instead.
        t = t.astype(x.dtype)

    itemsize = jnp.dtype(x.dtype).itemsize     # 4 (f32) or 2 (bf16/f16)
    sub = 32 // itemsize                       # min sublane tile: f32 -> 8, 16-bit -> 16
    slab = sub * _LANE                         # elements per 4 KiB slab
    n_slabs = pl.cdiv(M, slab)

    xf = x.reshape(N, M)
    tf = t.reshape(N, M)
    pad = n_slabs * slab - M
    if pad:
        # Ragged tail (< 1 slab per sample): pad with a very negative logit / zero target
        # so padded elements contribute exactly 0 to every sum (safe for f16/bf16 too).
        # TODO(synk): a fully copy-free ragged path needs manual DMA of the unaligned tail.
        xf = jnp.pad(xf, ((0, 0), (0, pad)), constant_values=_NEG_LOGIT)
        tf = jnp.pad(tf, ((0, 0), (0, pad)), constant_values=0)
    x4 = xf.reshape(N, n_slabs, sub, _LANE)    # zero-copy when M % slab == 0
    t4 = tf.reshape(N, n_slabs, sub, _LANE)

    # Batch folding for small images (amortizes ~0.35 us per-grid-step overhead).
    fold_cap = min(_MAX_BATCH_FOLD, max(1, _MAX_SLABS_PER_BLOCK // n_slabs))
    b_tile = _largest_divisor_at_most(N, fold_cap)
    # Balanced chunking of the slab axis: <= 4 MiB per input block, waste < 1 chunk.
    per_block = max(1, _MAX_SLABS_PER_BLOCK // b_tile)
    n_c = pl.cdiv(n_slabs, per_block)
    tr8 = pl.cdiv(n_slabs, n_c)
    mask_tail = n_c * tr8 > n_slabs            # last chunk reads past the slab axis
    chunk = max(1, 2 * itemsize)               # slabs per inner step: f32 -> 8, 16-bit -> 4

    kernel = functools.partial(_loss_kernel, b_tile=b_tile, tr8=tr8, chunk=chunk,
                               sub=sub, n_slabs=n_slabs, mask_tail=mask_tail)

    part_shape = jax.ShapeDtypeStruct((N, n_c, 1, 1), jnp.float32)
    in_spec = pl.BlockSpec((b_tile, tr8, sub, _LANE), lambda g, c: (g, c, 0, 0))
    out_spec = pl.BlockSpec((b_tile, 1, 1, 1), lambda g, c: (g, c, 0, 0))

    bce_p, st_p, s_p, t_p = pl.pallas_call(
        kernel,
        out_shape=(part_shape,) * 4,
        grid=(N // b_tile, n_c),
        in_specs=[in_spec, in_spec],
        out_specs=(out_spec,) * 4,
        compiler_params=pltpu.CompilerParams(
            dimension_semantics=("parallel", "parallel"),
            vmem_limit_bytes=32 * 1024 * 1024),
    )(x4, t4)

    # Tiny final combine in JAX (keeps both grid axes parallel / megacore-friendly).
    bce_mean = jnp.sum(bce_p) / jnp.float32(N * M)
    inter = jnp.sum(st_p, axis=(1, 2, 3))
    s_sum = jnp.sum(s_p, axis=(1, 2, 3))
    t_sum = jnp.sum(t_p, axis=(1, 2, 3))
    ratio = inter / (s_sum * t_sum + jnp.float32(eps))   # matches module: product + eps
    dice = 1.0 - 2.0 * jnp.mean(ratio)
    return bce_mean + dice


def _reference(out, target, eps=1e-6):
    x = out.astype(jnp.float32)
    t = target.astype(jnp.float32)
    bce = jnp.mean(jnp.maximum(x, 0.0) - x * t + jnp.log1p(jnp.exp(-jnp.abs(x))))
    s = jax.nn.sigmoid(x)
    inter = jnp.sum(s * t, axis=(1, 2, 3))
    ratio = inter / (jnp.sum(s, axis=(1, 2, 3)) * jnp.sum(t, axis=(1, 2, 3)) + eps)
    dice = 1.0 - 2.0 * jnp.mean(ratio)
    return bce + dice


if __name__ == "__main__":
    key = jax.random.PRNGKey(0)
    k1, k2 = jax.random.split(key)
    loss_fn = jax.jit(loss_with_logit)

    # Case 1: slab-aligned f32 (zero-copy fast path).
    N, C, H, W = 2, 4, 16, 16
    logits = jax.random.normal(k1, (N, C, H, W), dtype=jnp.float32)
    target = jax.random.bernoulli(k2, p=0.4, shape=(N, C, H, W)).astype(jnp.float32)
    loss = loss_fn(logits, target)
    jax.block_until_ready(loss)
    ref = _reference(logits, target)
    assert jnp.allclose(loss, ref, atol=2e-3, rtol=2e-3), (loss, ref)

    # Case 2: ragged C*H*W (tail-pad path).
    logits2 = jax.random.normal(k1, (2, 3, 10, 17), dtype=jnp.float32)
    target2 = jax.random.bernoulli(k2, p=0.3, shape=(2, 3, 10, 17)).astype(jnp.float32)
    loss2 = loss_fn(logits2, target2)
    jax.block_until_ready(loss2)
    ref2 = _reference(logits2, target2)
    assert jnp.allclose(loss2, ref2, atol=2e-3, rtol=2e-3), (loss2, ref2)

    # Case 3: bf16 inputs (16-sublane tile) with batch folding.
    logits3 = jax.random.normal(k1, (4, 1, 32, 32), dtype=jnp.bfloat16)
    target3 = jax.random.bernoulli(k2, p=0.5, shape=(4, 1, 32, 32)).astype(jnp.bfloat16)
    loss3 = loss_fn(logits3, target3)
    jax.block_until_ready(loss3)
    ref3 = _reference(logits3, target3)
    assert jnp.allclose(loss3, ref3, atol=2e-3, rtol=2e-3), (loss3, ref3)

    print("KERNEL_OK")
</pallas_src>

<mosaic_0001>
module attributes {stable_mosaic.version = 11 : i64} {
  func.func @_loss_kernel(%arg0: i32, %arg1: i32, %arg2: memref<2x1x8x128xf32, #tpu.memory_space<vmem>>, %arg3: memref<2x1x8x128xf32, #tpu.memory_space<vmem>>, %arg4: memref<2x1x1x1xf32, #tpu.memory_space<vmem>>, %arg5: memref<2x1x1x1xf32, #tpu.memory_space<vmem>>, %arg6: memref<2x1x1x1xf32, #tpu.memory_space<vmem>>, %arg7: memref<2x1x1x1xf32, #tpu.memory_space<vmem>>) attributes {dimension_semantics = [#tpu.dimension_semantics<parallel>, #tpu.dimension_semantics<parallel>], iteration_bounds = array<i64: 1, 1>, scalar_prefetch = 0 : i64, scratch_operands = 0 : i64, tpu.core_type = #tpu.core_type<tc>, window_params = [{transform_indices = @transform_0, window_bounds = array<i64: 2, 1, 8, 128>}, {transform_indices = @transform_1, window_bounds = array<i64: 2, 1, 8, 128>}, {transform_indices = @transform_2, window_bounds = array<i64: 2, 1, 1, 1>}, {transform_indices = @transform_3, window_bounds = array<i64: 2, 1, 1, 1>}, {transform_indices = @transform_4, window_bounds = array<i64: 2, 1, 1, 1>}, {transform_indices = @transform_5, window_bounds = array<i64: 2, 1, 1, 1>}]} {
    %cst = arith.constant 0.000000e+00 : f32
    %0 = vector.broadcast %cst : f32 to vector<8x128xf32>
    %c0 = arith.constant 0 : index
    %c0_0 = arith.constant 0 : index
    %c0_1 = arith.constant 0 : index
    %c0_2 = arith.constant 0 : index
    %1 = vector.load %arg2[%c0, %c0_0, %c0_1, %c0_2] : memref<2x1x8x128xf32, #tpu.memory_space<vmem>>, vector<1x1x8x128xf32>
    %2 = vector.shape_cast %1 : vector<1x1x8x128xf32> to vector<1x8x128xf32>
    %c0_3 = arith.constant 0 : index
    %c0_4 = arith.constant 0 : index
    %c0_5 = arith.constant 0 : index
    %c0_6 = arith.constant 0 : index
    %3 = vector.load %arg3[%c0_3, %c0_4, %c0_5, %c0_6] : memref<2x1x8x128xf32, #tpu.memory_space<vmem>>, vector<1x1x8x128xf32>
    %4 = vector.shape_cast %3 : vector<1x1x8x128xf32> to vector<1x8x128xf32>
    %5 = math.absf %2 : vector<1x8x128xf32>
    %cst_7 = arith.constant 0.000000e+00 : f32
    %6 = vector.broadcast %cst_7 : f32 to vector<1x8x128xf32>
    %7 = arith.subf %6, %5 : vector<1x8x128xf32>
    %8 = math.exp %7 : vector<1x8x128xf32>
    %cst_8 = arith.constant 0.000000e+00 : f32
    %9 = vector.broadcast %cst_8 : f32 to vector<1x8x128xf32>
    %10 = arith.maximumf %2, %9 : vector<1x8x128xf32>
    %11 = arith.mulf %2, %4 : vector<1x8x128xf32>
    %12 = arith.subf %10, %11 : vector<1x8x128xf32>
    %13 = math.log1p %8 : vector<1x8x128xf32>
    %14 = arith.addf %12, %13 : vector<1x8x128xf32>
    %cst_9 = arith.constant 0.000000e+00 : f32
    %15 = vector.broadcast %cst_9 : f32 to vector<1x8x128xf32>
    %16 = arith.cmpf oge, %2, %15 : vector<1x8x128xf32>
    %cst_10 = arith.constant 1.000000e+00 : f32
    %17 = vector.broadcast %cst_10 : f32 to vector<1x8x128xf32>
    %18 = arith.select %16, %17, %8 : vector<1x8x128xi1>, vector<1x8x128xf32>
    %cst_11 = arith.constant 1.000000e+00 : f32
    %19 = vector.broadcast %cst_11 : f32 to vector<1x8x128xf32>
    %20 = arith.addf %19, %8 : vector<1x8x128xf32>
    %21 = tpu.reciprocal %20 {approx = true} : vector<1x8x128xf32> -> vector<1x8x128xf32>
    %22 = arith.mulf %18, %21 : vector<1x8x128xf32>
    %cst_12 = arith.constant dense<0.000000e+00> : vector<8x128xf32>
    %23 = vector.multi_reduction <add>, %14, %cst_12 [0] : vector<1x8x128xf32> to vector<8x128xf32>
    %24 = arith.mulf %22, %4 : vector<1x8x128xf32>
    %cst_13 = arith.constant dense<0.000000e+00> : vector<8x128xf32>
    %25 = vector.multi_reduction <add>, %24, %cst_13 [0] : vector<1x8x128xf32> to vector<8x128xf32>
    %cst_14 = arith.constant dense<0.000000e+00> : vector<8x128xf32>
    %26 = vector.multi_reduction <add>, %22, %cst_14 [0] : vector<1x8x128xf32> to vector<8x128xf32>
    %cst_15 = arith.constant dense<0.000000e+00> : vector<8x128xf32>
    %27 = vector.multi_reduction <add>, %4, %cst_15 [0] : vector<1x8x128xf32> to vector<8x128xf32>
    %28 = arith.addf %0, %23 : vector<8x128xf32>
    %29 = arith.addf %0, %25 : vector<8x128xf32>
    %30 = arith.addf %0, %26 : vector<8x128xf32>
    %31 = arith.addf %0, %27 : vector<8x128xf32>
    %32 = vector.shape_cast %28 : vector<8x128xf32> to vector<1x8x128xf32>
    %cst_16 = arith.constant dense<0.000000e+00> : vector<1xf32>
    %33 = vector.multi_reduction <add>, %32, %cst_16 [1, 2] : vector<1x8x128xf32> to vector<1xf32>
    %34 = vector.shape_cast %33 : vector<1xf32> to vector<1x1x1xf32>
    %35 = vector.extract %34[0, 0, 0] : f32 from vector<1x1x1xf32>
    %36 = vector.broadcast %35 : f32 to vector<1x1x1xf32>
    %c0_17 = arith.constant 0 : index
    %c0_18 = arith.constant 0 : index
    %c0_19 = arith.constant 0 : index
    %c0_20 = arith.constant 0 : index
    %37 = vector.load %arg4[%c0_17, %c0_18, %c0_19, %c0_20] : memref<2x1x1x1xf32, #tpu.memory_space<vmem>>, vector<1x1x1x1xf32>
    %38 = vector.shape_cast %37 : vector<1x1x1x1xf32> to vector<1x1x1xf32>
    %39 = vector.shape_cast %36 : vector<1x1x1xf32> to vector<1x1x1x1xf32>
    tpu.vector_store %arg4[%c0_17, %c0_18, %c0_19, %c0_20], %39 {strides = array<i32>} : memref<2x1x1x1xf32, #tpu.memory_space<vmem>>, vector<1x1x1x1xf32>,
    %40 = vector.shape_cast %29 : vector<8x128xf32> to vector<1x8x128xf32>
    %cst_21 = arith.constant dense<0.000000e+00> : vector<1xf32>
    %41 = vector.multi_reduction <add>, %40, %cst_21 [1, 2] : vector<1x8x128xf32> to vector<1xf32>
    %42 = vector.shape_cast %41 : vector<1xf32> to vector<1x1x1xf32>
    %43 = vector.extract %42[0, 0, 0] : f32 from vector<1x1x1xf32>
    %44 = vector.broadcast %43 : f32 to vector<1x1x1xf32>
    %c0_22 = arith.constant 0 : index
    %c0_23 = arith.constant 0 : index
    %c0_24 = arith.constant 0 : index
    %c0_25 = arith.constant 0 : index
    %45 = vector.load %arg5[%c0_22, %c0_23, %c0_24, %c0_25] : memref<2x1x1x1xf32, #tpu.memory_space<vmem>>, vector<1x1x1x1xf32>
    %46 = vector.shape_cast %45 : vector<1x1x1x1xf32> to vector<1x1x1xf32>
    %47 = vector.shape_cast %44 : vector<1x1x1xf32> to vector<1x1x1x1xf32>
    tpu.vector_store %arg5[%c0_22, %c0_23, %c0_24, %c0_25], %47 {strides = array<i32>} : memref<2x1x1x1xf32, #tpu.memory_space<vmem>>, vector<1x1x1x1xf32>,
    %48 = vector.shape_cast %30 : vector<8x128xf32> to vector<1x8x128xf32>
    %cst_26 = arith.constant dense<0.000000e+00> : vector<1xf32>
    %49 = vector.multi_reduction <add>, %48, %cst_26 [1, 2] : vector<1x8x128xf32> to vector<1xf32>
    %50 = vector.shape_cast %49 : vector<1xf32> to vector<1x1x1xf32>
    %51 = vector.extract %50[0, 0, 0] : f32 from vector<1x1x1xf32>
    %52 = vector.broadcast %51 : f32 to vector<1x1x1xf32>
    %c0_27 = arith.constant 0 : index
    %c0_28 = arith.constant 0 : index
    %c0_29 = arith.constant 0 : index
    %c0_30 = arith.constant 0 : index
    %53 = vector.load %arg6[%c0_27, %c0_28, %c0_29, %c0_30] : memref<2x1x1x1xf32, #tpu.memory_space<vmem>>, vector<1x1x1x1xf32>
    %54 = vector.shape_cast %53 : vector<1x1x1x1xf32> to vector<1x1x1xf32>
    %55 = vector.shape_cast %52 : vector<1x1x1xf32> to vector<1x1x1x1xf32>
    tpu.vector_store %arg6[%c0_27, %c0_28, %c0_29, %c0_30], %55 {strides = array<i32>} : memref<2x1x1x1xf32, #tpu.memory_space<vmem>>, vector<1x1x1x1xf32>,
    %56 = vector.shape_cast %31 : vector<8x128xf32> to vector<1x8x128xf32>
    %cst_31 = arith.constant dense<0.000000e+00> : vector<1xf32>
    %57 = vector.multi_reduction <add>, %56, %cst_31 [1, 2] : vector<1x8x128xf32> to vector<1xf32>
    %58 = vector.shape_cast %57 : vector<1xf32> to vector<1x1x1xf32>
    %59 = vector.extract %58[0, 0, 0] : f32 from vector<1x1x1xf32>
    %60 = vector.broadcast %59 : f32 to vector<1x1x1xf32>
    %c0_32 = arith.constant 0 : index
    %c0_33 = arith.constant 0 : index
    %c0_34 = arith.constant 0 : index
    %c0_35 = arith.constant 0 : index
    %61 = vector.load %arg7[%c0_32, %c0_33, %c0_34, %c0_35] : memref<2x1x1x1xf32, #tpu.memory_space<vmem>>, vector<1x1x1x1xf32>
    %62 = vector.shape_cast %61 : vector<1x1x1x1xf32> to vector<1x1x1xf32>
    %63 = vector.shape_cast %60 : vector<1x1x1xf32> to vector<1x1x1x1xf32>
    tpu.vector_store %arg7[%c0_32, %c0_33, %c0_34, %c0_35], %63 {strides = array<i32>} : memref<2x1x1x1xf32, #tpu.memory_space<vmem>>, vector<1x1x1x1xf32>,
    %cst_36 = arith.constant 0.000000e+00 : f32
    %64 = vector.broadcast %cst_36 : f32 to vector<8x128xf32>
    %c1 = arith.constant 1 : index
    %c0_37 = arith.constant 0 : index
    %c0_38 = arith.constant 0 : index
    %c0_39 = arith.constant 0 : index
    %65 = vector.load %arg2[%c1, %c0_37, %c0_38, %c0_39] : memref<2x1x8x128xf32, #tpu.memory_space<vmem>>, vector<1x1x8x128xf32>
    %66 = vector.shape_cast %65 : vector<1x1x8x128xf32> to vector<1x8x128xf32>
    %c1_40 = arith.constant 1 : index
    %c0_41 = arith.constant 0 : index
    %c0_42 = arith.constant 0 : index
    %c0_43 = arith.constant 0 : index
    %67 = vector.load %arg3[%c1_40, %c0_41, %c0_42, %c0_43] : memref<2x1x8x128xf32, #tpu.memory_space<vmem>>, vector<1x1x8x128xf32>
    %68 = vector.shape_cast %67 : vector<1x1x8x128xf32> to vector<1x8x128xf32>
    %69 = math.absf %66 : vector<1x8x128xf32>
    %cst_44 = arith.constant 0.000000e+00 : f32
    %70 = vector.broadcast %cst_44 : f32 to vector<1x8x128xf32>
    %71 = arith.subf %70, %69 : vector<1x8x128xf32>
    %72 = math.exp %71 : vector<1x8x128xf32>
    %cst_45 = arith.constant 0.000000e+00 : f32
    %73 = vector.broadcast %cst_45 : f32 to vector<1x8x128xf32>
    %74 = arith.maximumf %66, %73 : vector<1x8x128xf32>
    %75 = arith.mulf %66, %68 : vector<1x8x128xf32>
    %76 = arith.subf %74, %75 : vector<1x8x128xf32>
    %77 = math.log1p %72 : vector<1x8x128xf32>
    %78 = arith.addf %76, %77 : vector<1x8x128xf32>
    %cst_46 = arith.constant 0.000000e+00 : f32
    %79 = vector.broadcast %cst_46 : f32 to vector<1x8x128xf32>
    %80 = arith.cmpf oge, %66, %79 : vector<1x8x128xf32>
    %cst_47 = arith.constant 1.000000e+00 : f32
    %81 = vector.broadcast %cst_47 : f32 to vector<1x8x128xf32>
    %82 = arith.select %80, %81, %72 : vector<1x8x128xi1>, vector<1x8x128xf32>
    %cst_48 = arith.constant 1.000000e+00 : f32
    %83 = vector.broadcast %cst_48 : f32 to vector<1x8x128xf32>
    %84 = arith.addf %83, %72 : vector<1x8x128xf32>
    %85 = tpu.reciprocal %84 {approx = true} : vector<1x8x128xf32> -> vector<1x8x128xf32>
    %86 = arith.mulf %82, %85 : vector<1x8x128xf32>
    %cst_49 = arith.constant dense<0.000000e+00> : vector<8x128xf32>
    %87 = vector.multi_reduction <add>, %78, %cst_49 [0] : vector<1x8x128xf32> to vector<8x128xf32>
    %88 = arith.mulf %86, %68 : vector<1x8x128xf32>
    %cst_50 = arith.constant dense<0.000000e+00> : vector<8x128xf32>
    %89 = vector.multi_reduction <add>, %88, %cst_50 [0] : vector<1x8x128xf32> to vector<8x128xf32>
    %cst_51 = arith.constant dense<0.000000e+00> : vector<8x128xf32>
    %90 = vector.multi_reduction <add>, %86, %cst_51 [0] : vector<1x8x128xf32> to vector<8x128xf32>
    %cst_52 = arith.constant dense<0.000000e+00> : vector<8x128xf32>
    %91 = vector.multi_reduction <add>, %68, %cst_52 [0] : vector<1x8x128xf32> to vector<8x128xf32>
    %92 = arith.addf %64, %87 : vector<8x128xf32>
    %93 = arith.addf %64, %89 : vector<8x128xf32>
    %94 = arith.addf %64, %90 : vector<8x128xf32>
    %95 = arith.addf %64, %91 : vector<8x128xf32>
    %96 = vector.shape_cast %92 : vector<8x128xf32> to vector<1x8x128xf32>
    %cst_53 = arith.constant dense<0.000000e+00> : vector<1xf32>
    %97 = vector.multi_reduction <add>, %96, %cst_53 [1, 2] : vector<1x8x128xf32> to vector<1xf32>
    %98 = vector.shape_cast %97 : vector<1xf32> to vector<1x1x1xf32>
    %99 = vector.extract %98[0, 0, 0] : f32 from vector<1x1x1xf32>
    %100 = vector.broadcast %99 : f32 to vector<1x1x1xf32>
    %c1_54 = arith.constant 1 : index
    %c0_55 = arith.constant 0 : index
    %c0_56 = arith.constant 0 : index
    %c0_57 = arith.constant 0 : index
    %101 = vector.load %arg4[%c1_54, %c0_55, %c0_56, %c0_57] : memref<2x1x1x1xf32, #tpu.memory_space<vmem>>, vector<1x1x1x1xf32>
    %102 = vector.shape_cast %101 : vector<1x1x1x1xf32> to vector<1x1x1xf32>
    %103 = vector.shape_cast %100 : vector<1x1x1xf32> to vector<1x1x1x1xf32>
    tpu.vector_store %arg4[%c1_54, %c0_55, %c0_56, %c0_57], %103 {strides = array<i32>} : memref<2x1x1x1xf32, #tpu.memory_space<vmem>>, vector<1x1x1x1xf32>,
    %104 = vector.shape_cast %93 : vector<8x128xf32> to vector<1x8x128xf32>
    %cst_58 = arith.constant dense<0.000000e+00> : vector<1xf32>
    %105 = vector.multi_reduction <add>, %104, %cst_58 [1, 2] : vector<1x8x128xf32> to vector<1xf32>
    %106 = vector.shape_cast %105 : vector<1xf32> to vector<1x1x1xf32>
    %107 = vector.extract %106[0, 0, 0] : f32 from vector<1x1x1xf32>
    %108 = vector.broadcast %107 : f32 to vector<1x1x1xf32>
    %c1_59 = arith.constant 1 : index
    %c0_60 = arith.constant 0 : index
    %c0_61 = arith.constant 0 : index
    %c0_62 = arith.constant 0 : index
    %109 = vector.load %arg5[%c1_59, %c0_60, %c0_61, %c0_62] : memref<2x1x1x1xf32, #tpu.memory_space<vmem>>, vector<1x1x1x1xf32>
    %110 = vector.shape_cast %109 : vector<1x1x1x1xf32> to vector<1x1x1xf32>
    %111 = vector.shape_cast %108 : vector<1x1x1xf32> to vector<1x1x1x1xf32>
    tpu.vector_store %arg5[%c1_59, %c0_60, %c0_61, %c0_62], %111 {strides = array<i32>} : memref<2x1x1x1xf32, #tpu.memory_space<vmem>>, vector<1x1x1x1xf32>,
    %112 = vector.shape_cast %94 : vector<8x128xf32> to vector<1x8x128xf32>
    %cst_63 = arith.constant dense<0.000000e+00> : vector<1xf32>
    %113 = vector.multi_reduction <add>, %112, %cst_63 [1, 2] : vector<1x8x128xf32> to vector<1xf32>
    %114 = vector.shape_cast %113 : vector<1xf32> to vector<1x1x1xf32>
    %115 = vector.extract %114[0, 0, 0] : f32 from vector<1x1x1xf32>
    %116 = vector.broadcast %115 : f32 to vector<1x1x1xf32>
    %c1_64 = arith.constant 1 : index
    %c0_65 = arith.constant 0 : index
    %c0_66 = arith.constant 0 : index
    %c0_67 = arith.constant 0 : index
    %117 = vector.load %arg6[%c1_64, %c0_65, %c0_66, %c0_67] : memref<2x1x1x1xf32, #tpu.memory_space<vmem>>, vector<1x1x1x1xf32>
    %118 = vector.shape_cast %117 : vector<1x1x1x1xf32> to vector<1x1x1xf32>
    %119 = vector.shape_cast %116 : vector<1x1x1xf32> to vector<1x1x1x1xf32>
    tpu.vector_store %arg6[%c1_64, %c0_65, %c0_66, %c0_67], %119 {strides = array<i32>} : memref<2x1x1x1xf32, #tpu.memory_space<vmem>>, vector<1x1x1x1xf32>,
    %120 = vector.shape_cast %95 : vector<8x128xf32> to vector<1x8x128xf32>
    %cst_68 = arith.constant dense<0.000000e+00> : vector<1xf32>
    %121 = vector.multi_reduction <add>, %120, %cst_68 [1, 2] : vector<1x8x128xf32> to vector<1xf32>
    %122 = vector.shape_cast %121 : vector<1xf32> to vector<1x1x1xf32>
    %123 = vector.extract %122[0, 0, 0] : f32 from vector<1x1x1xf32>
    %124 = vector.broadcast %123 : f32 to vector<1x1x1xf32>
    %c1_69 = arith.constant 1 : index
    %c0_70 = arith.constant 0 : index
    %c0_71 = arith.constant 0 : index
    %c0_72 = arith.constant 0 : index
    %125 = vector.load %arg7[%c1_69, %c0_70, %c0_71, %c0_72] : memref<2x1x1x1xf32, #tpu.memory_space<vmem>>, vector<1x1x1x1xf32>
    %126 = vector.shape_cast %125 : vector<1x1x1x1xf32> to vector<1x1x1xf32>
    %127 = vector.shape_cast %124 : vector<1x1x1xf32> to vector<1x1x1x1xf32>
    tpu.vector_store %arg7[%c1_69, %c0_70, %c0_71, %c0_72], %127 {strides = array<i32>} : memref<2x1x1x1xf32, #tpu.memory_space<vmem>>, vector<1x1x1x1xf32>,
    return
  }
  func.func @transform_0(%arg0: i32, %arg1: i32) -> (i32, i32, i32, i32) {
    %c0_i32 = arith.constant 0 : i32
    %c0_i32_0 = arith.constant 0 : i32
    %c0_i32_1 = arith.constant 0 : i32
    return %arg0, %arg1, %c0_i32, %c0_i32_0 : i32, i32, i32, i32
  }
  func.func @transform_1(%arg0: i32, %arg1: i32) -> (i32, i32, i32, i32) {
    %c0_i32 = arith.constant 0 : i32
    %c0_i32_0 = arith.constant 0 : i32
    %c0_i32_1 = arith.constant 0 : i32
    return %arg0, %arg1, %c0_i32, %c0_i32_0 : i32, i32, i32, i32
  }
  func.func @transform_2(%arg0: i32, %arg1: i32) -> (i32, i32, i32, i32) {
    %c0_i32 = arith.constant 0 : i32
    %c0_i32_0 = arith.constant 0 : i32
    %c0_i32_1 = arith.constant 0 : i32
    return %arg0, %arg1, %c0_i32, %c0_i32_0 : i32, i32, i32, i32
  }
  func.func @transform_3(%arg0: i32, %arg1: i32) -> (i32, i32, i32, i32) {
    %c0_i32 = arith.constant 0 : i32
    %c0_i32_0 = arith.constant 0 : i32
    %c0_i32_1 = arith.constant 0 : i32
    return %arg0, %arg1, %c0_i32, %c0_i32_0 : i32, i32, i32, i32
  }
  func.func @transform_4(%arg0: i32, %arg1: i32) -> (i32, i32, i32, i32) {
    %c0_i32 = arith.constant 0 : i32
    %c0_i32_0 = arith.constant 0 : i32
    %c0_i32_1 = arith.constant 0 : i32
    return %arg0, %arg1, %c0_i32, %c0_i32_0 : i32, i32, i32, i32
  }
  func.func @transform_5(%arg0: i32, %arg1: i32) -> (i32, i32, i32, i32) {
    %c0_i32 = arith.constant 0 : i32
    %c0_i32_0 = arith.constant 0 : i32
    %c0_i32_1 = arith.constant 0 : i32
    return %arg0, %arg1, %c0_i32, %c0_i32_0 : i32, i32, i32, i32
  }
}

</mosaic_0001>

<llo_original>
// kernel: loss_with_logit.1
$region0: #{loss_with_logit.1}
  #allocation0 [shape = 'u32[]', space=smem, size = 0x4, offset = 0x4, fixed_abs, tag = 'smem constant byte address 0x4 - core index']
  #allocation1 [shape = 'u32[144,128]{1,0:T(1,128)}', space=vmem, size = 0x12000, scoped, tag = 'internal scratch']
  %s0 = inlined_call_operand.vmem [shape: f32[2,1,8,128], index: 0, kind: input, shape index: {}]
  %s1 = inlined_call_operand.vmem [shape: f32[2,1,8,128], index: 1, kind: input, shape index: {}]
  %s2 = inlined_call_operand.vmem [shape: f32[2,1,1,1], index: 2, kind: output, shape index: {0}]
  %s3 = inlined_call_operand.vmem [shape: f32[2,1,1,1], index: 3, kind: output, shape index: {1}]
  %s4 = inlined_call_operand.vmem [shape: f32[2,1,1,1], index: 4, kind: output, shape index: {2}]
  %s5 = inlined_call_operand.vmem [shape: f32[2,1,1,1], index: 5, kind: output, shape index: {3}]
  %6 = xla_tuple %s2, %s3, %s4, %s5
  %s7 = sld [smem:[#allocation0]]
  $region42: #{loss_with_logit.1} parent=0
    _
  %s9 = ssub.s32 1, %s7
  %s10 = scalar_select 0, %s9, %s7
  // Predicated region
  $region2: #{loss_with_logit.1} parent=0 // pred_check
    _
  $region3: #{loss_with_logit.1} parent=0 // pred_check_branch
    %12 = sbr.rel (0) target = $region5
  $region4: #{loss_with_logit.1} parent=0 // pred_region
    _
  $region5: #{loss_with_logit.1} parent=0 // pred_fallthru
    _
  // Predicated region
  $region6: #{loss_with_logit.1} parent=0 // pred_check
    _
  $region7: #{loss_with_logit.1} parent=0 // pred_check_branch
    %14 = sbr.rel (0) target = $region9
  $region8: #{loss_with_logit.1} parent=0 // pred_region
    _
  $region9: #{loss_with_logit.1} parent=0 // pred_fallthru
    _
  %v15 = vld [vmem:[%s0] sm:$0xff]
  %v16 = vld [vmem:[%s1] sm:$0xff]
  %v17 = vand.u32 2147483647, %v15
  %v18 = vsub.f32 0.0, %v17
  %v19 = vmul.f32 %v18, 1.442695
  %v20 = vpow.pop %v19
  %v21 = vmax.f32 %v15, 0.0
  %v22 = vmul.f32 %v15, %v16
  %v23 = vsub.f32 %v21, %v22
  %v24 = vadd.f32 %v20, 1.0
  %v25 = vlog2.pop %v24
  %v26 = vmul.f32 %v25, 0.6931472
  %v27 = vmul.f32 -0.5, %v20
  %v28 = vadd.f32 %v27, 1.0
  %v29 = vmul.f32 %v28, %v20
  %v30 = vand.u32 2147483647, %v20
  %vm31 = vcmp.lt.f32.partialorder %v30, 0.0004427343
  %v32 = vsel %vm31, %v29, %v26
  %v33 = vadd.f32 %v23, %v32
  %vm34 = vcmp.ge.f32.partialorder %v15, 0.0
  %v35 = vsel %vm34, 1.0, %v20
  %v36 = vadd.f32 %v20, 1.0
  %v37 = vrcp.pop %v36
  %v38 = vmul.f32 %v35, %v37
  %v39 = vadd.f32 %v33, 0.0
  %v40 = vmul.f32 %v38, %v16
  %v41 = vadd.f32 %v40, 0.0
  %v42 = vadd.f32 %v38, 0.0
  %v43 = vadd.f32 %v16, 0.0
  %v44 = vadd.f32 %v39, 0.0
  %v45 = vadd.f32 %v41, 0.0
  %v46 = vadd.f32 %v42, 0.0
  %v47 = vadd.f32 %v43, 0.0
  %48 = vadd.xlane.f32.xlu0 %v44
  %v49 = vpop.xlane.xlu0 %48
  %v50 = vrot.slane %v49, 4
  %v51 = vadd.f32 %v49, %v50
  %v52 = vrot.slane %v51, 2
  %v53 = vadd.f32 %v51, %v52
  %v54 = vrot.slane %v53, 1
  %v55 = vadd.f32 %v53, %v54
  %s56 = vtos %v55
  %v57 = vstv %s56
  %vm58 = vcmask 0
  %59 = vst.msk [vmem:[%s2] sm:$0x1] %vm58, %v57
  %60 = vadd.xlane.f32.xlu0 %v45
  %v61 = vpop.xlane.xlu0 %60
  %v62 = vrot.slane %v61, 4
  %v63 = vadd.f32 %v61, %v62
  %v64 = vrot.slane %v63, 2
  %v65 = vadd.f32 %v63, %v64
  %v66 = vrot.slane %v65, 1
  %v67 = vadd.f32 %v65, %v66
  %s68 = vtos %v67
  %v69 = vstv %s68
  %70 = vst.msk [vmem:[%s3] sm:$0x1] %vm58, %v69
  %71 = vadd.xlane.f32.xlu0 %v46
  %v72 = vpop.xlane.xlu0 %71
  %v73 = vrot.slane %v72, 4
  %v74 = vadd.f32 %v72, %v73
  %v75 = vrot.slane %v74, 2
  %v76 = vadd.f32 %v74, %v75
  %v77 = vrot.slane %v76, 1
  %v78 = vadd.f32 %v76, %v77
  %s79 = vtos %v78
  %v80 = vstv %s79
  %81 = vst.msk [vmem:[%s4] sm:$0x1] %vm58, %v80
  %82 = vadd.xlane.f32.xlu0 %v47
  %v83 = vpop.xlane.xlu0 %82
  %v84 = vrot.slane %v83, 4
  %v85 = vadd.f32 %v83, %v84
  %v86 = vrot.slane %v85, 2
  %v87 = vadd.f32 %v85, %v86
  %v88 = vrot.slane %v87, 1
  %v89 = vadd.f32 %v87, %v88
  %s90 = vtos %v89
  %v91 = vstv %s90
  %92 = vst.msk [vmem:[%s5] sm:$0x1] %vm58, %v91
  %s93 = scalar_lea.vmem %s0, 8
  %v94 = vld [vmem:[%s93] sm:$0xff]
  %s95 = scalar_lea.vmem %s1, 8
  %v96 = vld [vmem:[%s95] sm:$0xff]
  %v97 = vand.u32 2147483647, %v94
  %v98 = vsub.f32 0.0, %v97
  %v99 = vmul.f32 %v98, 1.442695
  %v100 = vpow.pop %v99
  %v101 = vmax.f32 %v94, 0.0
  %v102 = vmul.f32 %v94, %v96
  %v103 = vsub.f32 %v101, %v102
  %v104 = vadd.f32 %v100, 1.0
  %v105 = vlog2.pop %v104
  %v106 = vmul.f32 %v105, 0.6931472
  %v107 = vmul.f32 -0.5, %v100
  %v108 = vadd.f32 %v107, 1.0
  %v109 = vmul.f32 %v108, %v100
  %v110 = vand.u32 2147483647, %v100
  %vm111 = vcmp.lt.f32.partialorder %v110, 0.0004427343
  %v112 = vsel %vm111, %v109, %v106
  %v113 = vadd.f32 %v103, %v112
  %vm114 = vcmp.ge.f32.partialorder %v94, 0.0
  %v115 = vsel %vm114, 1.0, %v100
  %v116 = vadd.f32 %v100, 1.0
  %v117 = vrcp.pop %v116
  %v118 = vmul.f32 %v115, %v117
  %v119 = vadd.f32 %v113, 0.0
  %v120 = vmul.f32 %v118, %v96
  %v121 = vadd.f32 %v120, 0.0
  %v122 = vadd.f32 %v118, 0.0
  %v123 = vadd.f32 %v96, 0.0
  %v124 = vadd.f32 %v119, 0.0
  %v125 = vadd.f32 %v121, 0.0
  %v126 = vadd.f32 %v122, 0.0
  %v127 = vadd.f32 %v123, 0.0
  %128 = vadd.xlane.f32.xlu0 %v124
  %v129 = vpop.xlane.xlu0 %128
  %v130 = vrot.slane %v129, 4
  %v131 = vadd.f32 %v129, %v130
  %v132 = vrot.slane %v131, 2
  %v133 = vadd.f32 %v131, %v132
  %v134 = vrot.slane %v133, 1
  %v135 = vadd.f32 %v133, %v134
  %s136 = vtos %v135
  %v137 = vstv %s136
  %s138 = scalar_lea.vmem %s2, 1
  %139 = vst.msk [vmem:[%s138] sm:$0x1] %vm58, %v137
  %140 = vadd.xlane.f32.xlu0 %v125
  %v141 = vpop.xlane.xlu0 %140
  %v142 = vrot.slane %v141, 4
  %v143 = vadd.f32 %v141, %v142
  %v144 = vrot.slane %v143, 2
  %v145 = vadd.f32 %v143, %v144
  %v146 = vrot.slane %v145, 1
  %v147 = vadd.f32 %v145, %v146
  %s148 = vtos %v147
  %v149 = vstv %s148
  %s150 = scalar_lea.vmem %s3, 1
  %151 = vst.msk [vmem:[%s150] sm:$0x1] %vm58, %v149
  %152 = vadd.xlane.f32.xlu0 %v126
  %v153 = vpop.xlane.xlu0 %152
  %v154 = vrot.slane %v153, 4
  %v155 = vadd.f32 %v153, %v154
  %v156 = vrot.slane %v155, 2
  %v157 = vadd.f32 %v155, %v156
  %v158 = vrot.slane %v157, 1
  %v159 = vadd.f32 %v157, %v158
  %s160 = vtos %v159
  %v161 = vstv %s160
  %s162 = scalar_lea.vmem %s4, 1
  %163 = vst.msk [vmem:[%s162] sm:$0x1] %vm58, %v161
  %164 = vadd.xlane.f32.xlu0 %v127
  %v165 = vpop.xlane.xlu0 %164
  %v166 = vrot.slane %v165, 4
  %v167 = vadd.f32 %v165, %v166
  %v168 = vrot.slane %v167, 2
  %v169 = vadd.f32 %v167, %v168
  %v170 = vrot.slane %v169, 1
  %v171 = vadd.f32 %v169, %v170
  %s172 = vtos %v171
  %v173 = vstv %s172
  %s174 = scalar_lea.vmem %s5, 1
  %175 = vst.msk [vmem:[%s174] sm:$0x1] %vm58, %v173
  // Predicated region
  $region10: #{loss_with_logit.1} parent=0 // pred_check
    _
  $region11: #{loss_with_logit.1} parent=0 // pred_check_branch
    %177 = sbr.rel (0) target = $region13
  $region12: #{loss_with_logit.1} parent=0 // pred_region
    _
  $region13: #{loss_with_logit.1} parent=0 // pred_fallthru
    _
  // Predicated region
  $region14: #{loss_with_logit.1} parent=0 // pred_check
    _
  $region15: #{loss_with_logit.1} parent=0 // pred_check_branch
    %179 = sbr.rel (0) target = $region17
  $region16: #{loss_with_logit.1} parent=0 // pred_region
    _
  $region17: #{loss_with_logit.1} parent=0 // pred_fallthru
    _
  // Predicated region
  $region18: #{loss_with_logit.1} parent=0 // pred_check
    _
  $region19: #{loss_with_logit.1} parent=0 // pred_check_branch
    %181 = sbr.rel (0) target = $region21
  $region20: #{loss_with_logit.1} parent=0 // pred_region
    _
  $region21: #{loss_with_logit.1} parent=0 // pred_fallthru
    _
  // Predicated region
  $region22: #{loss_with_logit.1} parent=0 // pred_check
    _
  $region23: #{loss_with_logit.1} parent=0 // pred_check_branch
    %183 = sbr.rel (0) target = $region25
  $region24: #{loss_with_logit.1} parent=0 // pred_region
    _
  $region25: #{loss_with_logit.1} parent=0 // pred_fallthru
    _
  // Predicated region
  $region26: #{loss_with_logit.1} parent=0 // pred_check
    _
  $region27: #{loss_with_logit.1} parent=0 // pred_check_branch
    %185 = sbr.rel (0) target = $region29
  $region28: #{loss_with_logit.1} parent=0 // pred_region
    _
  $region29: #{loss_with_logit.1} parent=0 // pred_fallthru
    _
  // Predicated region
  $region30: #{loss_with_logit.1} parent=0 // pred_check
    _
  $region31: #{loss_with_logit.1} parent=0 // pred_check_branch
    %187 = sbr.rel (0) target = $region33
  $region32: #{loss_with_logit.1} parent=0 // pred_region
    _
  $region33: #{loss_with_logit.1} parent=0 // pred_fallthru
    _
  // Predicated region
  $region34: #{loss_with_logit.1} parent=0 // pred_check
    _
  $region35: #{loss_with_logit.1} parent=0 // pred_check_branch
    %189 = sbr.rel (0) target = $region37
  $region36: #{loss_with_logit.1} parent=0 // pred_region
    _
  $region37: #{loss_with_logit.1} parent=0 // pred_fallthru
    _
  // Predicated region
  $region38: #{loss_with_logit.1} parent=0 // pred_check
    _
  $region39: #{loss_with_logit.1} parent=0 // pred_check_branch
    %191 = sbr.rel (0) target = $region41
  $region40: #{loss_with_logit.1} parent=0 // pred_region
    _
  $region41: #{loss_with_logit.1} parent=0 // pred_fallthru
    _

</llo_original>
